<compile_context>
chip_gen: v6e
topology: v6e:2x2x1
jax: 0.10.0
libtpu: 0.0.40
codegen_flags: <defaults>
</compile_context>

<pallas_src>
import jax
import jax.numpy as jnp
import numpy as np
from jax import lax
from jax.experimental import pallas as pl
from jax.experimental.pallas import tpu as pltpu


def _block_kernel(xph_ref, xres_ref, w1_ref, w2_ref, b1_ref, b2_ref, o_ref, hpad_ref):
    # xph_ref : (N, H+2, W*Cin)    input, zero-padded along H only, lane-dense
    # xres_ref: (N, H,   W*Cin)    unpadded input for the residual add
    # w1_ref  : (3*W*Cin,  W*Cout) banded conv1 weights (BN1 scale folded in)
    # w2_ref  : (3*W*Cout, W*Cout) banded conv2 weights (BN2 scale folded in)
    # b1_ref  : (1, W*Cout)        tiled BN1 shift
    # b2_ref  : (1, W*Cout)        tiled BN2 shift
    # o_ref   : (N, H, W*Cout)
    # hpad_ref: (N, H+2, W*Cout)   scratch: intermediate activation, H-padded
    N, Hp2, WCi = xph_ref.shape
    H = Hp2 - 2
    WCo = o_ref.shape[-1]
    NH = N * H

    # ---- conv1 (+ folded BN1 scale): one K = 3*W*Cin matmul on the MXU ----
    # dy-shifted row views; slices are sublane-only (lane layout untouched), concat offsets
    # are 128-aligned.
    a1 = jnp.concatenate(
        [xph_ref[:, dy:dy + H, :].reshape(NH, WCi) for dy in range(3)], axis=-1)
    y = jnp.dot(a1, w1_ref[...], preferred_element_type=jnp.float32)

    # ---- BN1 shift + ReLU ----
    y = jnp.maximum(y + b1_ref[...], 0.0)
    # Dropout: inference semantics -> identity.
    # TODO(synk): training-mode dropout would use pltpu.prng_seed / prng_random_bits.

    # ---- re-pad along H only (zero just the two border rows; interior overwritten) ----
    zrow = jnp.zeros((N, 1, WCo), jnp.float32)
    hpad_ref[:, 0:1, :] = zrow
    hpad_ref[:, H + 1:H + 2, :] = zrow
    hpad_ref[:, 1:H + 1, :] = y.reshape(N, H, WCo)

    # ---- conv2 (+ folded BN2 scale): one K = 3*W*Cout matmul ----
    a2 = jnp.concatenate(
        [hpad_ref[:, dy:dy + H, :].reshape(NH, WCo) for dy in range(3)], axis=-1)
    z = jnp.dot(a2, w2_ref[...], preferred_element_type=jnp.float32)

    # ---- BN2 shift + residual add + ReLU ----
    z = z + b2_ref[...] + xres_ref[...].reshape(NH, WCo)
    o_ref[...] = jnp.maximum(z, 0.0).reshape(N, H, WCo)


def _banded_weight(w_hwio, W):
    """(3, 3, Ci, Co) conv kernel -> (3*W*Ci, W*Co) banded matmul weight.

    B[dy*W*Ci + xw*Ci + ci, x*Co + co] = w[dy, xw-x+1, ci, co] if 0 <= xw-x+1 <= 2 else 0.
    The band clipping implements the SAME zero-padding along W.
    """
    Ci, Co = w_hwio.shape[2], w_hwio.shape[3]
    xi = jnp.arange(W)
    dx = jnp.arange(3)
    # delta[x, xw, dx] = 1 iff xw == x + dx - 1
    delta = (xi[None, :, None] == (xi[:, None, None] + dx[None, None, :] - 1)
             ).astype(w_hwio.dtype)
    B = jnp.einsum('xwd,ydio->ywixo', delta, w_hwio)      # (3, W, Ci, W, Co)
    return B.reshape(3 * W * Ci, W * Co)


def block_forward(x_nhwc, w1_hwio, w2_hwio,
                  g1, be1, m1, v1, g2, be2, m2, v2, eps=1e-5):
    """x_nhwc: (N, H, W, Cin) float32. Returns (N, H, W, Cout) float32."""
    N, H, W, Cin = x_nhwc.shape
    Cout = w1_hwio.shape[-1]
    assert Cin == Cout, "i_downsample=None requires in_channels == out_channels"

    # Fold BatchNorm (inference):  y = conv(x) * scale + shift, scale folded into the weights.
    inv1 = (g1 / jnp.sqrt(v1 + eps)).astype(jnp.float32)
    inv2 = (g2 / jnp.sqrt(v2 + eps)).astype(jnp.float32)
    sh1 = (be1 - m1 * inv1).astype(jnp.float32)
    sh2 = (be2 - m2 * inv2).astype(jnp.float32)
    w1f = w1_hwio.astype(jnp.float32) * inv1[None, None, None, :]
    w2f = w2_hwio.astype(jnp.float32) * inv2[None, None, None, :]

    # Banded (im2col-along-W) matmul weights.
    W1 = _banded_weight(w1f, W)                      # (3*W*Cin,  W*Cout)
    W2 = _banded_weight(w2f, W)                      # (3*W*Cout, W*Cout)

    # BN shifts tiled to the lane-dense (x, c) layout.
    b1 = jnp.tile(sh1, W).reshape(1, W * Cout)
    b2 = jnp.tile(sh2, W).reshape(1, W * Cout)

    # Input: pad along H only; keep (x, c) flattened on the lane axis (W*Cin = 128 here).
    xph = jnp.pad(x_nhwc, ((0, 0), (1, 1), (0, 0), (0, 0))
                  ).reshape(N, H + 2, W * Cin).astype(jnp.float32)
    xres = x_nhwc.reshape(N, H, W * Cin).astype(jnp.float32)

    out = pl.pallas_call(
        _block_kernel,
        out_shape=jax.ShapeDtypeStruct((N, H, W * Cout), jnp.float32),
        grid_spec=pltpu.PrefetchScalarGridSpec(
            num_scalar_prefetch=0,
            grid=(1,),
            in_specs=[
                pl.BlockSpec((N, H + 2, W * Cin), lambda i: (0, 0, 0)),
                pl.BlockSpec((N, H, W * Cin), lambda i: (0, 0, 0)),
                pl.BlockSpec((3 * W * Cin, W * Cout), lambda i: (0, 0)),
                pl.BlockSpec((3 * W * Cout, W * Cout), lambda i: (0, 0)),
                pl.BlockSpec((1, W * Cout), lambda i: (0, 0)),
                pl.BlockSpec((1, W * Cout), lambda i: (0, 0)),
            ],
            out_specs=pl.BlockSpec((N, H, W * Cout), lambda i: (0, 0, 0)),
            scratch_shapes=[pltpu.VMEM((N, H + 2, W * Cout), jnp.float32)],
        ),
        compiler_params=pltpu.CompilerParams(
            dimension_semantics=("arbitrary",)),
    )(xph, xres, W1, W2, b1, b2)

    return out.reshape(N, H, W, Cout)


def _reference(x_nhwc, w1_hwio, w2_hwio, g1, be1, m1, v1, g2, be2, m2, v2, eps=1e-5):
    dn = ("NHWC", "HWIO", "NHWC")
    h = lax.conv_general_dilated(x_nhwc, w1_hwio, (1, 1), "SAME", dimension_numbers=dn)
    h = (h - m1) / jnp.sqrt(v1 + eps) * g1 + be1
    h = jnp.maximum(h, 0.0)
    h = lax.conv_general_dilated(h, w2_hwio, (1, 1), "SAME", dimension_numbers=dn)
    h = (h - m2) / jnp.sqrt(v2 + eps) * g2 + be2
    return jnp.maximum(h + x_nhwc, 0.0)


if __name__ == "__main__":
    # Shapes consistent with Block(in_channels=8, out_channels=8, stride=1); W*C = 128 (lane-dense).
    N, C, H, W = 2, 8, 16, 16
    key = jax.random.PRNGKey(0)
    k_x, k_w1, k_w2, k_g1, k_b1, k_m1, k_v1, k_g2, k_b2, k_m2, k_v2 = jax.random.split(key, 11)

    # Input in PyTorch layout NCHW, then transpose to kernel layout NHWC.
    x_nchw = jax.random.normal(k_x, (N, C, H, W), jnp.float32)
    x_nhwc = jnp.transpose(x_nchw, (0, 2, 3, 1))

    # Conv weights (HWIO). PyTorch stores OIHW; shapes here are equivalent (3,3,Cin,Cout).
    w1 = jax.random.normal(k_w1, (3, 3, C, C), jnp.float32) * 0.1
    w2 = jax.random.normal(k_w2, (3, 3, C, C), jnp.float32) * 0.1

    # BatchNorm parameters / running stats (deterministic synthetic values).
    g1 = 1.0 + 0.1 * jax.random.normal(k_g1, (C,), jnp.float32)
    be1 = 0.1 * jax.random.normal(k_b1, (C,), jnp.float32)
    m1 = 0.1 * jax.random.normal(k_m1, (C,), jnp.float32)
    v1 = jnp.abs(jax.random.normal(k_v1, (C,), jnp.float32)) + 0.5
    g2 = 1.0 + 0.1 * jax.random.normal(k_g2, (C,), jnp.float32)
    be2 = 0.1 * jax.random.normal(k_b2, (C,), jnp.float32)
    m2 = 0.1 * jax.random.normal(k_m2, (C,), jnp.float32)
    v2 = jnp.abs(jax.random.normal(k_v2, (C,), jnp.float32)) + 0.5

    out = block_forward(x_nhwc, w1, w2, g1, be1, m1, v1, g2, be2, m2, v2)
    out = jax.block_until_ready(out)

    ref = jax.block_until_ready(
        _reference(x_nhwc, w1, w2, g1, be1, m1, v1, g2, be2, m2, v2))

    assert out.shape == (N, H, W, C)
    np.testing.assert_allclose(np.asarray(out), np.asarray(ref), rtol=1e-4, atol=1e-4)
    print("KERNEL_OK")
</pallas_src>

<mosaic_0001>
module attributes {stable_mosaic.version = 11 : i64} {
  func.func @_block_kernel(%arg0: i32, %arg1: memref<2x18x128xf32, #tpu.memory_space<vmem>>, %arg2: memref<2x16x128xf32, #tpu.memory_space<vmem>>, %arg3: memref<384x128xf32, #tpu.memory_space<vmem>>, %arg4: memref<384x128xf32, #tpu.memory_space<vmem>>, %arg5: memref<1x128xf32, #tpu.memory_space<vmem>>, %arg6: memref<1x128xf32, #tpu.memory_space<vmem>>, %arg7: memref<2x16x128xf32, #tpu.memory_space<vmem>>, %arg8: memref<2x18x128xf32, #tpu.memory_space<vmem>>) attributes {dimension_semantics = [#tpu.dimension_semantics<arbitrary>], iteration_bounds = array<i64: 1>, scalar_prefetch = 0 : i64, scratch_operands = 1 : i64, tpu.core_type = #tpu.core_type<tc>, window_params = [{pipeline_mode = #tpu.pipeline_mode<synchronous>, transform_indices = @transform_0, window_bounds = array<i64: 2, 18, 128>}, {pipeline_mode = #tpu.pipeline_mode<synchronous>, transform_indices = @transform_1, window_bounds = array<i64: 2, 16, 128>}, {pipeline_mode = #tpu.pipeline_mode<synchronous>, transform_indices = @transform_2, window_bounds = array<i64: 384, 128>}, {pipeline_mode = #tpu.pipeline_mode<synchronous>, transform_indices = @transform_3, window_bounds = array<i64: 384, 128>}, {pipeline_mode = #tpu.pipeline_mode<synchronous>, transform_indices = @transform_4, window_bounds = array<i64: 1, 128>}, {pipeline_mode = #tpu.pipeline_mode<synchronous>, transform_indices = @transform_5, window_bounds = array<i64: 1, 128>}, {pipeline_mode = #tpu.pipeline_mode<synchronous>, transform_indices = @transform_6, window_bounds = array<i64: 2, 16, 128>}]} {
    %c0 = arith.constant 0 : index
    %c0_0 = arith.constant 0 : index
    %c0_1 = arith.constant 0 : index
    %0 = vector.load %arg1[%c0, %c0_0, %c0_1] : memref<2x18x128xf32, #tpu.memory_space<vmem>>, vector<2x16x128xf32>
    %1 = vector.shape_cast %0 : vector<2x16x128xf32> to vector<32x128xf32>
    %c0_2 = arith.constant 0 : index
    %c1 = arith.constant 1 : index
    %c0_3 = arith.constant 0 : index
    %2 = vector.load %arg1[%c0_2, %c1, %c0_3] : memref<2x18x128xf32, #tpu.memory_space<vmem>>, vector<2x16x128xf32>
    %3 = vector.shape_cast %2 : vector<2x16x128xf32> to vector<32x128xf32>
    %c0_4 = arith.constant 0 : index
    %c2 = arith.constant 2 : index
    %c0_5 = arith.constant 0 : index
    %4 = vector.load %arg1[%c0_4, %c2, %c0_5] : memref<2x18x128xf32, #tpu.memory_space<vmem>>, vector<2x16x128xf32>
    %5 = vector.shape_cast %4 : vector<2x16x128xf32> to vector<32x128xf32>
    %6 = tpu.concatenate %1, %3, %5 in 1 : vector<32x128xf32>, vector<32x128xf32>, vector<32x128xf32> -> vector<32x384xf32>
    %c0_6 = arith.constant 0 : index
    %c0_7 = arith.constant 0 : index
    %7 = vector.load %arg3[%c0_6, %c0_7] : memref<384x128xf32, #tpu.memory_space<vmem>>, vector<384x128xf32>
    %cst = arith.constant dense<0.000000e+00> : vector<32x128xf32>
    %8 = tpu.matmul %6, %7, %cst {dimension_numbers = #tpu.dot_dimension_numbers<[1], [0], [0], [1], [0, 0, 1, 1], [], []>} : vector<32x384xf32>, vector<384x128xf32>, vector<32x128xf32> -> vector<32x128xf32>
    %c0_8 = arith.constant 0 : index
    %c0_9 = arith.constant 0 : index
    %9 = vector.load %arg5[%c0_8, %c0_9] : memref<1x128xf32, #tpu.memory_space<vmem>>, vector<1x128xf32>
    %10 = vector.broadcast %9 : vector<1x128xf32> to vector<32x128xf32>
    %11 = arith.addf %8, %10 : vector<32x128xf32>
    %cst_10 = arith.constant 0.000000e+00 : f32
    %12 = vector.broadcast %cst_10 : f32 to vector<32x128xf32>
    %13 = arith.maximumf %11, %12 : vector<32x128xf32>
    %cst_11 = arith.constant 0.000000e+00 : f32
    %14 = vector.broadcast %cst_11 : f32 to vector<2x1x128xf32>
    %c0_12 = arith.constant 0 : index
    %c0_13 = arith.constant 0 : index
    %c0_14 = arith.constant 0 : index
    %15 = vector.load %arg8[%c0_12, %c0_13, %c0_14] : memref<2x18x128xf32, #tpu.memory_space<vmem>>, vector<2x1x128xf32>
    tpu.vector_store %arg8[%c0_12, %c0_13, %c0_14], %14 {strides = array<i32>} : memref<2x18x128xf32, #tpu.memory_space<vmem>>, vector<2x1x128xf32>,
    %c0_15 = arith.constant 0 : index
    %c17 = arith.constant 17 : index
    %c0_16 = arith.constant 0 : index
    %16 = vector.load %arg8[%c0_15, %c17, %c0_16] : memref<2x18x128xf32, #tpu.memory_space<vmem>>, vector<2x1x128xf32>
    tpu.vector_store %arg8[%c0_15, %c17, %c0_16], %14 {strides = array<i32>} : memref<2x18x128xf32, #tpu.memory_space<vmem>>, vector<2x1x128xf32>,
    %17 = vector.shape_cast %13 : vector<32x128xf32> to vector<2x16x128xf32>
    %c0_17 = arith.constant 0 : index
    %c1_18 = arith.constant 1 : index
    %c0_19 = arith.constant 0 : index
    %18 = vector.load %arg8[%c0_17, %c1_18, %c0_19] : memref<2x18x128xf32, #tpu.memory_space<vmem>>, vector<2x16x128xf32>
    tpu.vector_store %arg8[%c0_17, %c1_18, %c0_19], %17 {strides = array<i32>} : memref<2x18x128xf32, #tpu.memory_space<vmem>>, vector<2x16x128xf32>,
    %c0_20 = arith.constant 0 : index
    %c0_21 = arith.constant 0 : index
    %c0_22 = arith.constant 0 : index
    %19 = vector.load %arg8[%c0_20, %c0_21, %c0_22] : memref<2x18x128xf32, #tpu.memory_space<vmem>>, vector<2x16x128xf32>
    %20 = vector.shape_cast %19 : vector<2x16x128xf32> to vector<32x128xf32>
    %c0_23 = arith.constant 0 : index
    %c1_24 = arith.constant 1 : index
    %c0_25 = arith.constant 0 : index
    %21 = vector.load %arg8[%c0_23, %c1_24, %c0_25] : memref<2x18x128xf32, #tpu.memory_space<vmem>>, vector<2x16x128xf32>
    %22 = vector.shape_cast %21 : vector<2x16x128xf32> to vector<32x128xf32>
    %c0_26 = arith.constant 0 : index
    %c2_27 = arith.constant 2 : index
    %c0_28 = arith.constant 0 : index
    %23 = vector.load %arg8[%c0_26, %c2_27, %c0_28] : memref<2x18x128xf32, #tpu.memory_space<vmem>>, vector<2x16x128xf32>
    %24 = vector.shape_cast %23 : vector<2x16x128xf32> to vector<32x128xf32>
    %25 = tpu.concatenate %20, %22, %24 in 1 : vector<32x128xf32>, vector<32x128xf32>, vector<32x128xf32> -> vector<32x384xf32>
    %c0_29 = arith.constant 0 : index
    %c0_30 = arith.constant 0 : index
    %26 = vector.load %arg4[%c0_29, %c0_30] : memref<384x128xf32, #tpu.memory_space<vmem>>, vector<384x128xf32>
    %cst_31 = arith.constant dense<0.000000e+00> : vector<32x128xf32>
    %27 = tpu.matmul %25, %26, %cst_31 {dimension_numbers = #tpu.dot_dimension_numbers<[1], [0], [0], [1], [0, 0, 1, 1], [], []>} : vector<32x384xf32>, vector<384x128xf32>, vector<32x128xf32> -> vector<32x128xf32>
    %c0_32 = arith.constant 0 : index
    %c0_33 = arith.constant 0 : index
    %28 = vector.load %arg6[%c0_32, %c0_33] : memref<1x128xf32, #tpu.memory_space<vmem>>, vector<1x128xf32>
    %29 = vector.broadcast %28 : vector<1x128xf32> to vector<32x128xf32>
    %30 = arith.addf %27, %29 : vector<32x128xf32>
    %c0_34 = arith.constant 0 : index
    %c0_35 = arith.constant 0 : index
    %c0_36 = arith.constant 0 : index
    %31 = vector.load %arg2[%c0_34, %c0_35, %c0_36] : memref<2x16x128xf32, #tpu.memory_space<vmem>>, vector<2x16x128xf32>
    %32 = vector.shape_cast %31 : vector<2x16x128xf32> to vector<32x128xf32>
    %33 = arith.addf %30, %32 : vector<32x128xf32>
    %cst_37 = arith.constant 0.000000e+00 : f32
    %34 = vector.broadcast %cst_37 : f32 to vector<32x128xf32>
    %35 = arith.maximumf %33, %34 : vector<32x128xf32>
    %36 = vector.shape_cast %35 : vector<32x128xf32> to vector<2x16x128xf32>
    %c0_38 = arith.constant 0 : index
    %c0_39 = arith.constant 0 : index
    %c0_40 = arith.constant 0 : index
    %37 = vector.load %arg7[%c0_38, %c0_39, %c0_40] : memref<2x16x128xf32, #tpu.memory_space<vmem>>, vector<2x16x128xf32>
    tpu.vector_store %arg7[%c0_38, %c0_39, %c0_40], %36 {strides = array<i32>} : memref<2x16x128xf32, #tpu.memory_space<vmem>>, vector<2x16x128xf32>,
    return
  }
  func.func @transform_0(%arg0: i32) -> (i32, i32, i32) {
    %c0_i32 = arith.constant 0 : i32
    %c0_i32_0 = arith.constant 0 : i32
    %c0_i32_1 = arith.constant 0 : i32
    %c0_i32_2 = arith.constant 0 : i32
    return %c0_i32, %c0_i32_0, %c0_i32_1 : i32, i32, i32
  }
  func.func @transform_1(%arg0: i32) -> (i32, i32, i32) {
    %c0_i32 = arith.constant 0 : i32
    %c0_i32_0 = arith.constant 0 : i32
    %c0_i32_1 = arith.constant 0 : i32
    %c0_i32_2 = arith.constant 0 : i32
    return %c0_i32, %c0_i32_0, %c0_i32_1 : i32, i32, i32
  }
  func.func @transform_2(%arg0: i32) -> (i32, i32) {
    %c0_i32 = arith.constant 0 : i32
    %c0_i32_0 = arith.constant 0 : i32
    %c0_i32_1 = arith.constant 0 : i32
    return %c0_i32, %c0_i32_0 : i32, i32
  }
  func.func @transform_3(%arg0: i32) -> (i32, i32) {
    %c0_i32 = arith.constant 0 : i32
    %c0_i32_0 = arith.constant 0 : i32
    %c0_i32_1 = arith.constant 0 : i32
    return %c0_i32, %c0_i32_0 : i32, i32
  }
  func.func @transform_4(%arg0: i32) -> (i32, i32) {
    %c0_i32 = arith.constant 0 : i32
    %c0_i32_0 = arith.constant 0 : i32
    %c0_i32_1 = arith.constant 0 : i32
    return %c0_i32, %c0_i32_0 : i32, i32
  }
  func.func @transform_5(%arg0: i32) -> (i32, i32) {
    %c0_i32 = arith.constant 0 : i32
    %c0_i32_0 = arith.constant 0 : i32
    %c0_i32_1 = arith.constant 0 : i32
    return %c0_i32, %c0_i32_0 : i32, i32
  }
  func.func @transform_6(%arg0: i32) -> (i32, i32, i32) {
    %c0_i32 = arith.constant 0 : i32
    %c0_i32_0 = arith.constant 0 : i32
    %c0_i32_1 = arith.constant 0 : i32
    %c0_i32_2 = arith.constant 0 : i32
    return %c0_i32, %c0_i32_0, %c0_i32_1 : i32, i32, i32
  }
}

</mosaic_0001>

<llo_original>
// kernel: tpu_custom_call.1
$region0: #{tpu_custom_call.1}
  #allocation0 [shape = 'u32[]', space=smem, size = 0x4, offset = 0x4, fixed_abs, tag = 'smem constant byte address 0x4 - core index']
  #allocation1 [shape = 'u32[144,128]{1,0:T(1,128)}', space=vmem, size = 0x12000, scoped, tag = 'internal scratch']
  #allocation2 [shape = 'f32[2,18,128]{2,1,0:T(8,128)}', space=vmem, size = 0x6000, scoped, tag = 'scratch operand']
  %s0 = inlined_call_operand.vmem [shape: f32[2,18,128], index: 0, kind: input, shape index: {}]
  %s1 = inlined_call_operand.vmem [shape: f32[2,16,128], index: 1, kind: input, shape index: {}]
  %s2 = inlined_call_operand.hbm [shape: f32[384,128], index: 2, kind: input, shape index: {}]
  %s3 = inlined_call_operand.hbm [shape: f32[384,128], index: 3, kind: input, shape index: {}]
  %s4 = inlined_call_operand.vmem [shape: f32[1,128], index: 4, kind: input, shape index: {}]
  %s5 = inlined_call_operand.vmem [shape: f32[1,128], index: 5, kind: input, shape index: {}]
  %s6 = inlined_call_operand.hbm [shape: f32[2,16,128], index: 6, kind: output, shape index: {}]
  %s7 = sld [smem:[#allocation0]]
  $region42: #{tpu_custom_call.1} parent=0
    _
  %s9 = ssub.s32 1, %s7
  %s10 = scalar_select 0, %s9, %s7
  $region1: #{tpu_custom_call.1} parent=0
    #allocation3 [shape = 'u8[196608]{0}', space=vmem, size = 0x30000, scoped, tag = 'input window, operand 2, single buffered']
    #allocation4 [shape = 's32[1]{0}', space=sflag, size = 0x4, scoped, tag = 'scoped memory for tpu_custom_call.1']
    #allocation5 [shape = 's32[1]{0}', space=sflag, size = 0x4, scoped, tag = 'scoped memory for tpu_custom_call.1']
    #allocation6 [shape = 'u8[196608]{0}', space=vmem, size = 0x30000, scoped, tag = 'input window, operand 3, single buffered']
    #allocation7 [shape = 's32[1]{0}', space=sflag, size = 0x4, scoped, tag = 'scoped memory for tpu_custom_call.1']
    #allocation8 [shape = 'u8[16384]{0}', space=vmem, size = 0x4000, scoped, tag = 'output window, operand 0, single buffered']
    %11 = vsyncpa [#allocation4], 0
    %12 = vsyncpa [#allocation7], 0
    %13 = vsyncpa [#allocation5], 0
    // Predicated region
    $region2: #{tpu_custom_call.1} parent=1 // pred_check
      _
    $region3: #{tpu_custom_call.1} parent=1 // pred_check_branch
      %15 = sbr.rel (0) target = $region5
    $region4: #{tpu_custom_call.1} parent=1 // pred_region
      _
    $region5: #{tpu_custom_call.1} parent=1 // pred_fallthru
      _
    // Predicated region
    $region6: #{tpu_custom_call.1} parent=1 // pred_check
      _
    $region7: #{tpu_custom_call.1} parent=1 // pred_check_branch
      %17 = sbr.rel (0) target = $region9
    $region8: #{tpu_custom_call.1} parent=1 // pred_region
      _
    $region9: #{tpu_custom_call.1} parent=1 // pred_fallthru
      _
    // Predicated region
    $region10: #{tpu_custom_call.1} parent=1 // pred_check
      _
    $region11: #{tpu_custom_call.1} parent=1 // pred_check_branch
      %19 = sbr.rel (0) target = $region13
    $region12: #{tpu_custom_call.1} parent=1 // pred_region
      %s21 = ssub.s32 6144, 6144
      %22 = vsyncadd [#allocation4], %s21
      %s23 = sshll.u32 [#allocation3], 4
      %s24 = int_to_ptr.vmem [resolvable:$true] %s23
      %29 = dma.hbm_to_vmem [thread:$0]  %s2, 6144, %s24, [#allocation4], 128, 128, 8
    $region13: #{tpu_custom_call.1} parent=1 // pred_fallthru
      _
    // Predicated region
    $region14: #{tpu_custom_call.1} parent=1 // pred_check
      _
    $region15: #{tpu_custom_call.1} parent=1 // pred_check_branch
      %31 = sbr.rel (0) target = $region17
    $region16: #{tpu_custom_call.1} parent=1 // pred_region
      %s33 = ssub.s32 6144, 6144
      %34 = vsyncadd [#allocation7], %s33
      %s35 = sshll.u32 [#allocation6], 4
      %s36 = int_to_ptr.vmem [resolvable:$true] %s35
      %41 = dma.hbm_to_vmem [thread:$0]  %s3, 6144, %s36, [#allocation7], 128, 128, 8
    $region17: #{tpu_custom_call.1} parent=1 // pred_fallthru
      _
    // Predicated region
    $region18: #{tpu_custom_call.1} parent=1 // pred_check
      _
    $region19: #{tpu_custom_call.1} parent=1 // pred_check_branch
      %43 = sbr.rel (0) target = $region21
    $region20: #{tpu_custom_call.1} parent=1 // pred_region
      _
    $region21: #{tpu_custom_call.1} parent=1 // pred_fallthru
      _
    // Predicated region
    $region22: #{tpu_custom_call.1} parent=1 // pred_check
      _
    $region23: #{tpu_custom_call.1} parent=1 // pred_check_branch
      %45 = sbr.rel (0) target = $region25
    $region24: #{tpu_custom_call.1} parent=1 // pred_region
      _
    $region25: #{tpu_custom_call.1} parent=1 // pred_fallthru
      _
    // Predicated region
    $region26: #{tpu_custom_call.1} parent=1 // pred_check
      _
    $region27: #{tpu_custom_call.1} parent=1 // pred_check_branch
      %47 = sbr.rel (0) target = $region29
    $region28: #{tpu_custom_call.1} parent=1 // pred_region
      %48 = dma.done [#allocation4], 6144
    $region29: #{tpu_custom_call.1} parent=1 // pred_fallthru
      _
    // Predicated region
    $region30: #{tpu_custom_call.1} parent=1 // pred_check
      _
    $region31: #{tpu_custom_call.1} parent=1 // pred_check_branch
      %50 = sbr.rel (0) target = $region33
    $region32: #{tpu_custom_call.1} parent=1 // pred_region
      %51 = dma.done [#allocation7], 6144
    $region33: #{tpu_custom_call.1} parent=1 // pred_fallthru
      _
    %v52 = vld [vmem:[%s0] sm:$0xff]
    %v53 = vld [vmem:[%s0 + $0x8] sm:$0xff]
    %v54 = vld [vmem:[%s0 + $0x18] sm:$0xff]
    %v55 = vld [vmem:[%s0 + $0x20] sm:$0xff]
    %v56 = vld [vmem:[%s0 + $0x1] sm:$0xff]
    %v57 = vld [vmem:[%s0 + $0x9] sm:$0xff]
    %v58 = vld [vmem:[%s0 + $0x19] sm:$0xff]
    %v59 = vld [vmem:[%s0 + $0x21] sm:$0xff]
    %v60 = vld [vmem:[%s0 + $0x2] sm:$0xff]
    %v61 = vld [vmem:[%s0 + $0xa] sm:$0xff]
    %v62 = vld [vmem:[%s0 + $0x1a] sm:$0xff]
    %v63 = vld [vmem:[%s0 + $0x22] sm:$0xff]
    %v64 = vld [vmem:[#allocation3] sm:$0xff]
    %v65 = vld [vmem:[#allocation3 + $0x8] sm:$0xff]
    %v66 = vld [vmem:[#allocation3 + $0x10] sm:$0xff]
    %v67 = vld [vmem:[#allocation3 + $0x18] sm:$0xff]
    %v68 = vld [vmem:[#allocation3 + $0x20] sm:$0xff]
    %v69 = vld [vmem:[#allocation3 + $0x28] sm:$0xff]
    %v70 = vld [vmem:[#allocation3 + $0x30] sm:$0xff]
    %v71 = vld [vmem:[#allocation3 + $0x38] sm:$0xff]
    %v72 = vld [vmem:[#allocation3 + $0x40] sm:$0xff]
    %v73 = vld [vmem:[#allocation3 + $0x48] sm:$0xff]
    %v74 = vld [vmem:[#allocation3 + $0x50] sm:$0xff]
    %v75 = vld [vmem:[#allocation3 + $0x58] sm:$0xff]
    %v76 = vld [vmem:[#allocation3 + $0x60] sm:$0xff]
    %v77 = vld [vmem:[#allocation3 + $0x68] sm:$0xff]
    %v78 = vld [vmem:[#allocation3 + $0x70] sm:$0xff]
    %v79 = vld [vmem:[#allocation3 + $0x78] sm:$0xff]
    %v80 = vld [vmem:[#allocation3 + $0x80] sm:$0xff]
    %v81 = vld [vmem:[#allocation3 + $0x88] sm:$0xff]
    %v82 = vld [vmem:[#allocation3 + $0x90] sm:$0xff]
    %v83 = vld [vmem:[#allocation3 + $0x98] sm:$0xff]
    %v84 = vld [vmem:[#allocation3 + $0xa0] sm:$0xff]
    %v85 = vld [vmem:[#allocation3 + $0xa8] sm:$0xff]
    %v86 = vld [vmem:[#allocation3 + $0xb0] sm:$0xff]
    %v87 = vld [vmem:[#allocation3 + $0xb8] sm:$0xff]
    %v88 = vld [vmem:[#allocation3 + $0xc0] sm:$0xff]
    %v89 = vld [vmem:[#allocation3 + $0xc8] sm:$0xff]
    %v90 = vld [vmem:[#allocation3 + $0xd0] sm:$0xff]
    %v91 = vld [vmem:[#allocation3 + $0xd8] sm:$0xff]
    %v92 = vld [vmem:[#allocation3 + $0xe0] sm:$0xff]
    %v93 = vld [vmem:[#allocation3 + $0xe8] sm:$0xff]
    %v94 = vld [vmem:[#allocation3 + $0xf0] sm:$0xff]
    %v95 = vld [vmem:[#allocation3 + $0xf8] sm:$0xff]
    %v96 = vld [vmem:[#allocation3 + $0x100] sm:$0xff]
    %v97 = vld [vmem:[#allocation3 + $0x108] sm:$0xff]
    %v98 = vld [vmem:[#allocation3 + $0x110] sm:$0xff]
    %v99 = vld [vmem:[#allocation3 + $0x118] sm:$0xff]
    %v100 = vld [vmem:[#allocation3 + $0x120] sm:$0xff]
    %v101 = vld [vmem:[#allocation3 + $0x128] sm:$0xff]
    %v102 = vld [vmem:[#allocation3 + $0x130] sm:$0xff]
    %v103 = vld [vmem:[#allocation3 + $0x138] sm:$0xff]
    %v104 = vld [vmem:[#allocation3 + $0x140] sm:$0xff]
    %v105 = vld [vmem:[#allocation3 + $0x148] sm:$0xff]
    %v106 = vld [vmem:[#allocation3 + $0x150] sm:$0xff]
    %v107 = vld [vmem:[#allocation3 + $0x158] sm:$0xff]
    %v108 = vld [vmem:[#allocation3 + $0x160] sm:$0xff]
    %v109 = vld [vmem:[#allocation3 + $0x168] sm:$0xff]
    %v110 = vld [vmem:[#allocation3 + $0x170] sm:$0xff]
    %v111 = vld [vmem:[#allocation3 + $0x178] sm:$0xff]
    %v112 = vld [vmem:[%s4] sm:$0x1]
    %v114 = vlaneseq
    %v115 = vshrl.u32 %v114, 7
    %v116 = vsub.s32 0, %v115
    %v117 = vrot.slane %v112, %v116
    %119 = vmatprep.subr.mxu0 0.0
    %120 = vmatpush1.msra.mxu0 %v79
    %121 = vmatprep.subr.mxu0 0.0
    %122 = vmatpush1.msra.mxu0 %v78
    %123 = vmatprep.subr.mxu0 0.0
    %124 = vmatpush1.msra.mxu0 %v77
    %125 = vmatprep.subr.mxu0 0.0
    %126 = vmatpush1.msra.mxu0 %v76
    %127 = vmatprep.subr.mxu0 0.0
    %128 = vmatpush1.msra.mxu0 %v75
    %129 = vmatprep.subr.mxu0 0.0
    %130 = vmatpush1.msra.mxu0 %v74
    %131 = vmatprep.subr.mxu0 0.0
    %132 = vmatpush1.msra.mxu0 %v73
    %133 = vmatprep.subr.mxu0 0.0
    %134 = vmatpush1.msra.mxu0 %v72
    %135 = vmatprep.subr.mxu0 0.0
    %136 = vmatpush1.msra.mxu0 %v71
    %137 = vmatprep.subr.mxu0 0.0
    %138 = vmatpush1.msra.mxu0 %v70
    %139 = vmatprep.subr.mxu0 0.0
    %140 = vmatpush1.msra.mxu0 %v69
    %141 = vmatprep.subr.mxu0 0.0
    %142 = vmatpush1.msra.mxu0 %v68
    %143 = vmatprep.subr.mxu0 0.0
    %144 = vmatpush1.msra.mxu0 %v67
    %145 = vmatprep.subr.mxu0 0.0
    %146 = vmatpush1.msra.mxu0 %v66
    %147 = vmatprep.subr.mxu0 0.0
    %148 = vmatpush1.msra.mxu0 %v65
    %149 = vmatprep.subr.mxu0 0.0
    %150 = vmatpush1.msra.mxu0 %v64
    %151 = vmatprep.subr.mxu0 0.0
    %152 = vmatpush2.msra.mxu0 %v95
    %153 = vmatprep.subr.mxu0 0.0
    %154 = vmatpush2.msra.mxu0 %v94
    %155 = vmatprep.subr.mxu0 0.0
    %156 = vmatpush2.msra.mxu0 %v93
    %157 = vmatprep.subr.mxu0 0.0
    %158 = vmatpush2.msra.mxu0 %v92
    %159 = vmatprep.subr.mxu0 0.0
    %160 = vmatpush2.msra.mxu0 %v91
    %161 = vmatprep.subr.mxu0 0.0
    %162 = vmatpush2.msra.mxu0 %v90
    %163 = vmatprep.subr.mxu0 0.0
    %164 = vmatpush2.msra.mxu0 %v89
    %165 = vmatprep.subr.mxu0 0.0
    %166 = vmatpush2.msra.mxu0 %v88
    %167 = vmatprep.subr.mxu0 0.0
    %168 = vmatpush2.msra.mxu0 %v87
    %169 = vmatprep.subr.mxu0 0.0
    %170 = vmatpush2.msra.mxu0 %v86
    %171 = vmatprep.subr.mxu0 0.0
    %172 = vmatpush2.msra.mxu0 %v85
    %173 = vmatprep.subr.mxu0 0.0
    %174 = vmatpush2.msra.mxu0 %v84
    %175 = vmatprep.subr.mxu0 0.0
    %176 = vmatpush2.msra.mxu0 %v83
    %177 = vmatprep.subr.mxu0 0.0
    %178 = vmatpush2.msra.mxu0 %v82
    %179 = vmatprep.subr.mxu0 0.0
    %180 = vmatpush2.msra.mxu0 %v81
    %181 = vmatprep.subr.mxu0 0.0
    %182 = vmatpush2.msra.mxu0 %v80
    %183 = vmatprep.mubr.f32.mxu0 %v56
    %184 = vmatmul.mubr.f32.gmra.mxu0 %v52
    %v185 = vpop.f32.mrf.mxu0
    %v186 = vadd.f32 %v117, %v185
    %v187 = vpop.f32.mrf.mxu0
    %188 = vmatprep.mubr.f32.mxu0 %v57
    %189 = vmatmul.mubr.f32.gmra.mxu0 %v53
    %v190 = vpop.f32.mrf.mxu0
    %v191 = vadd.f32 %v117, %v190
    %v192 = vpop.f32.mrf.mxu0
    %193 = vmatprep.mubr.f32.mxu0 %v58
    %194 = vmatmul.mubr.f32.gmra.mxu0 %v54
    %v195 = vpop.f32.mrf.mxu0
    %v196 = vadd.f32 %v117, %v195
    %v197 = vpop.f32.mrf.mxu0
    %198 = vmatprep.mubr.f32.mxu0 %v59
    %199 = vmatmul.mubr.f32.gmra.mxu0 %v55
    %v200 = vpop.f32.mrf.mxu0
    %v201 = vadd.f32 %v117, %v200
    %v202 = vpop.f32.mrf.mxu0
    %203 = vdwg.mxu0
    %204 = vmatprep.subr.mxu0 0.0
    %205 = vmatpush1.msra.mxu0 %v111
    %206 = vmatprep.subr.mxu0 0.0
    %207 = vmatpush1.msra.mxu0 %v110
    %208 = vmatprep.subr.mxu0 0.0
    %209 = vmatpush1.msra.mxu0 %v109
    %210 = vmatprep.subr.mxu0 0.0
    %211 = vmatpush1.msra.mxu0 %v108
    %212 = vmatprep.subr.mxu0 0.0
    %213 = vmatpush1.msra.mxu0 %v107
    %214 = vmatprep.subr.mxu0 0.0
    %215 = vmatpush1.msra.mxu0 %v106
    %216 = vmatprep.subr.mxu0 0.0
    %217 = vmatpush1.msra.mxu0 %v105
    %218 = vmatprep.subr.mxu0 0.0
    %219 = vmatpush1.msra.mxu0 %v104
    %220 = vmatprep.subr.mxu0 0.0
    %221 = vmatpush1.msra.mxu0 %v103
    %222 = vmatprep.subr.mxu0 0.0
    %223 = vmatpush1.msra.mxu0 %v102
    %224 = vmatprep.subr.mxu0 0.0
    %225 = vmatpush1.msra.mxu0 %v101
    %226 = vmatprep.subr.mxu0 0.0
    %227 = vmatpush1.msra.mxu0 %v100
    %228 = vmatprep.subr.mxu0 0.0
    %229 = vmatpush1.msra.mxu0 %v99
    %230 = vmatprep.subr.mxu0 0.0
    %231 = vmatpush1.msra.mxu0 %v98
    %232 = vmatprep.subr.mxu0 0.0
    %233 = vmatpush1.msra.mxu0 %v97
    %234 = vmatprep.subr.mxu0 0.0
    %235 = vmatpush1.msra.mxu0 %v96
    %236 = vmatprep.subr.mxu0 0.0
    %237 = vmatpush2.msra.mxu0 0.0
    %238 = vmatprep.subr.mxu0 0.0
    %239 = vmatpush2.msra.mxu0 0.0
    %240 = vmatprep.subr.mxu0 0.0
    %241 = vmatpush2.msra.mxu0 0.0
    %242 = vmatprep.subr.mxu0 0.0
    %243 = vmatpush2.msra.mxu0 0.0
    %244 = vmatprep.subr.mxu0 0.0
    %245 = vmatpush2.msra.mxu0 0.0
    %246 = vmatprep.subr.mxu0 0.0
    %247 = vmatpush2.msra.mxu0 0.0
    %248 = vmatprep.subr.mxu0 0.0
    %249 = vmatpush2.msra.mxu0 0.0
    %250 = vmatprep.subr.mxu0 0.0
    %251 = vmatpush2.msra.mxu0 0.0
    %252 = vmatprep.subr.mxu0 0.0
    %253 = vmatpush2.msra.mxu0 0.0
    %254 = vmatprep.subr.mxu0 0.0
    %255 = vmatpush2.msra.mxu0 0.0
    %256 = vmatprep.subr.mxu0 0.0
    %257 = vmatpush2.msra.mxu0 0.0
    %258 = vmatprep.subr.mxu0 0.0
    %259 = vmatpush2.msra.mxu0 0.0
    %260 = vmatprep.subr.mxu0 0.0
    %261 = vmatpush2.msra.mxu0 0.0
    %262 = vmatprep.subr.mxu0 0.0
    %263 = vmatpush2.msra.mxu0 0.0
    %264 = vmatprep.subr.mxu0 0.0
    %265 = vmatpush2.msra.mxu0 0.0
    %266 = vmatprep.subr.mxu0 0.0
    %267 = vmatpush2.msra.mxu0 0.0
    %268 = vmatprep.mubr.f32.mxu0 0.0
    %269 = vmatmul.mubr.f32.gmra.mxu0 %v60
    %v270 = vpop.f32.mrf.mxu0
    %v271 = vadd.f32 %v186, %v270
    %v272 = vpop.f32.mrf.mxu0
    %273 = vmatprep.mubr.f32.mxu0 0.0
    %274 = vmatmul.mubr.f32.gmra.mxu0 %v61
    %v275 = vpop.f32.mrf.mxu0
    %v276 = vadd.f32 %v191, %v275
    %v277 = vpop.f32.mrf.mxu0
    %278 = vmatprep.mubr.f32.mxu0 0.0
    %279 = vmatmul.mubr.f32.gmra.mxu0 %v62
    %v280 = vpop.f32.mrf.mxu0
    %v281 = vadd.f32 %v196, %v280
    %v282 = vpop.f32.mrf.mxu0
    %283 = vmatprep.mubr.f32.mxu0 0.0
    %284 = vmatmul.mubr.f32.gmra.mxu0 %v63
    %v285 = vpop.f32.mrf.mxu0
    %v286 = vadd.f32 %v201, %v285
    %v287 = vpop.f32.mrf.mxu0
    %288 = vdwg.mxu0
    %v289 = vmax.f32 %v271, 0.0
    %v290 = vmax.f32 %v276, 0.0
    %v291 = vmax.f32 %v281, 0.0
    %v292 = vmax.f32 %v286, 0.0
    %293 = vst [vmem:[#allocation2] sm:$0x1] 0.0
    %294 = vst [vmem:[#allocation2 + $0x18] sm:$0x1] 0.0
    %295 = vst [vmem:[#allocation2 + $0x11] sm:$0x1] 0.0
    %296 = vst [vmem:[#allocation2 + $0x29] sm:$0x1] 0.0
    %297 = vst [vmem:[#allocation2 + $0x1] sm:$0xff] %v289
    %298 = vst [vmem:[#allocation2 + $0x9] sm:$0xff] %v290
    %299 = vst [vmem:[#allocation2 + $0x19] sm:$0xff] %v291
    %300 = vst [vmem:[#allocation2 + $0x21] sm:$0xff] %v292
    %v301 = vld [vmem:[#allocation2] sm:$0xff]
    %v302 = vld [vmem:[#allocation2 + $0x8] sm:$0xff]
    %v303 = vld [vmem:[#allocation2 + $0x18] sm:$0xff]
    %v304 = vld [vmem:[#allocation2 + $0x20] sm:$0xff]
    %v305 = vld [vmem:[#allocation2 + $0x1] sm:$0xff]
    %v306 = vld [vmem:[#allocation2 + $0x9] sm:$0xff]
    %v307 = vld [vmem:[#allocation2 + $0x19] sm:$0xff]
    %v308 = vld [vmem:[#allocation2 + $0x21] sm:$0xff]
    %v309 = vld [vmem:[#allocation2 + $0x2] sm:$0xff]
    %v310 = vld [vmem:[#allocation2 + $0xa] sm:$0xff]
    %v311 = vld [vmem:[#allocation2 + $0x1a] sm:$0xff]
    %v312 = vld [vmem:[#allocation2 + $0x22] sm:$0xff]
    %v313 = vld [vmem:[#allocation6] sm:$0xff]
    %v314 = vld [vmem:[#allocation6 + $0x8] sm:$0xff]
    %v315 = vld [vmem:[#allocation6 + $0x10] sm:$0xff]
    %v316 = vld [vmem:[#allocation6 + $0x18] sm:$0xff]
    %v317 = vld [vmem:[#allocation6 + $0x20] sm:$0xff]
    %v318 = vld [vmem:[#allocation6 + $0x28] sm:$0xff]
    %v319 = vld [vmem:[#allocation6 + $0x30] sm:$0xff]
    %v320 = vld [vmem:[#allocation6 + $0x38] sm:$0xff]
    %v321 = vld [vmem:[#allocation6 + $0x40] sm:$0xff]
    %v322 = vld [vmem:[#allocation6 + $0x48] sm:$0xff]
    %v323 = vld [vmem:[#allocation6 + $0x50] sm:$0xff]
    %v324 = vld [vmem:[#allocation6 + $0x58] sm:$0xff]
    %v325 = vld [vmem:[#allocation6 + $0x60] sm:$0xff]
    %v326 = vld [vmem:[#allocation6 + $0x68] sm:$0xff]
    %v327 = vld [vmem:[#allocation6 + $0x70] sm:$0xff]
    %v328 = vld [vmem:[#allocation6 + $0x78] sm:$0xff]
    %v329 = vld [vmem:[#allocation6 + $0x80] sm:$0xff]
    %v330 = vld [vmem:[#allocation6 + $0x88] sm:$0xff]
    %v331 = vld [vmem:[#allocation6 + $0x90] sm:$0xff]
    %v332 = vld [vmem:[#allocation6 + $0x98] sm:$0xff]
    %v333 = vld [vmem:[#allocation6 + $0xa0] sm:$0xff]
    %v334 = vld [vmem:[#allocation6 + $0xa8] sm:$0xff]
    %v335 = vld [vmem:[#allocation6 + $0xb0] sm:$0xff]
    %v336 = vld [vmem:[#allocation6 + $0xb8] sm:$0xff]
    %v337 = vld [vmem:[#allocation6 + $0xc0] sm:$0xff]
    %v338 = vld [vmem:[#allocation6 + $0xc8] sm:$0xff]
    %v339 = vld [vmem:[#allocation6 + $0xd0] sm:$0xff]
    %v340 = vld [vmem:[#allocation6 + $0xd8] sm:$0xff]
    %v341 = vld [vmem:[#allocation6 + $0xe0] sm:$0xff]
    %v342 = vld [vmem:[#allocation6 + $0xe8] sm:$0xff]
    %v343 = vld [vmem:[#allocation6 + $0xf0] sm:$0xff]
    %v344 = vld [vmem:[#allocation6 + $0xf8] sm:$0xff]
    %v345 = vld [vmem:[#allocation6 + $0x100] sm:$0xff]
    %v346 = vld [vmem:[#allocation6 + $0x108] sm:$0xff]
    %v347 = vld [vmem:[#allocation6 + $0x110] sm:$0xff]
    %v348 = vld [vmem:[#allocation6 + $0x118] sm:$0xff]
    %v349 = vld [vmem:[#allocation6 + $0x120] sm:$0xff]
    %v350 = vld [vmem:[#allocation6 + $0x128] sm:$0xff]
    %v351 = vld [vmem:[#allocation6 + $0x130] sm:$0xff]
    %v352 = vld [vmem:[#allocation6 + $0x138] sm:$0xff]
    %v353 = vld [vmem:[#allocation6 + $0x140] sm:$0xff]
    %v354 = vld [vmem:[#allocation6 + $0x148] sm:$0xff]
    %v355 = vld [vmem:[#allocation6 + $0x150] sm:$0xff]
    %v356 = vld [vmem:[#allocation6 + $0x158] sm:$0xff]
    %v357 = vld [vmem:[#allocation6 + $0x160] sm:$0xff]
    %v358 = vld [vmem:[#allocation6 + $0x168] sm:$0xff]
    %v359 = vld [vmem:[#allocation6 + $0x170] sm:$0xff]
    %v360 = vld [vmem:[#allocation6 + $0x178] sm:$0xff]
    %v361 = vld [vmem:[%s5] sm:$0x1]
    %v363 = vlaneseq
    %v364 = vshrl.u32 %v363, 7
    %v365 = vsub.s32 0, %v364
    %v366 = vrot.slane %v361, %v365
    %368 = vmatprep.subr.mxu0 0.0
    %369 = vmatpush1.msra.mxu0 %v328
    %370 = vmatprep.subr.mxu0 0.0
    %371 = vmatpush1.msra.mxu0 %v327
    %372 = vmatprep.subr.mxu0 0.0
    %373 = vmatpush1.msra.mxu0 %v326
    %374 = vmatprep.subr.mxu0 0.0
    %375 = vmatpush1.msra.mxu0 %v325
    %376 = vmatprep.subr.mxu0 0.0
    %377 = vmatpush1.msra.mxu0 %v324
    %378 = vmatprep.subr.mxu0 0.0
    %379 = vmatpush1.msra.mxu0 %v323
    %380 = vmatprep.subr.mxu0 0.0
    %381 = vmatpush1.msra.mxu0 %v322
    %382 = vmatprep.subr.mxu0 0.0
    %383 = vmatpush1.msra.mxu0 %v321
    %384 = vmatprep.subr.mxu0 0.0
    %385 = vmatpush1.msra.mxu0 %v320
    %386 = vmatprep.subr.mxu0 0.0
    %387 = vmatpush1.msra.mxu0 %v319
    %388 = vmatprep.subr.mxu0 0.0
    %389 = vmatpush1.msra.mxu0 %v318
    %390 = vmatprep.subr.mxu0 0.0
    %391 = vmatpush1.msra.mxu0 %v317
    %392 = vmatprep.subr.mxu0 0.0
    %393 = vmatpush1.msra.mxu0 %v316
    %394 = vmatprep.subr.mxu0 0.0
    %395 = vmatpush1.msra.mxu0 %v315
    %396 = vmatprep.subr.mxu0 0.0
    %397 = vmatpush1.msra.mxu0 %v314
    %398 = vmatprep.subr.mxu0 0.0
    %399 = vmatpush1.msra.mxu0 %v313
    %400 = vmatprep.subr.mxu0 0.0
    %401 = vmatpush2.msra.mxu0 %v344
    %402 = vmatprep.subr.mxu0 0.0
    %403 = vmatpush2.msra.mxu0 %v343
    %404 = vmatprep.subr.mxu0 0.0
    %405 = vmatpush2.msra.mxu0 %v342
    %406 = vmatprep.subr.mxu0 0.0
    %407 = vmatpush2.msra.mxu0 %v341
    %408 = vmatprep.subr.mxu0 0.0
    %409 = vmatpush2.msra.mxu0 %v340
    %410 = vmatprep.subr.mxu0 0.0
    %411 = vmatpush2.msra.mxu0 %v339
    %412 = vmatprep.subr.mxu0 0.0
    %413 = vmatpush2.msra.mxu0 %v338
    %414 = vmatprep.subr.mxu0 0.0
    %415 = vmatpush2.msra.mxu0 %v337
    %416 = vmatprep.subr.mxu0 0.0
    %417 = vmatpush2.msra.mxu0 %v336
    %418 = vmatprep.subr.mxu0 0.0
    %419 = vmatpush2.msra.mxu0 %v335
    %420 = vmatprep.subr.mxu0 0.0
    %421 = vmatpush2.msra.mxu0 %v334
    %422 = vmatprep.subr.mxu0 0.0
    %423 = vmatpush2.msra.mxu0 %v333
    %424 = vmatprep.subr.mxu0 0.0
    %425 = vmatpush2.msra.mxu0 %v332
    %426 = vmatprep.subr.mxu0 0.0
    %427 = vmatpush2.msra.mxu0 %v331
    %428 = vmatprep.subr.mxu0 0.0
    %429 = vmatpush2.msra.mxu0 %v330
    %430 = vmatprep.subr.mxu0 0.0
    %431 = vmatpush2.msra.mxu0 %v329
    %432 = vmatprep.mubr.f32.mxu0 %v305
    %433 = vmatmul.mubr.f32.gmra.mxu0 %v301
    %v434 = vpop.f32.mrf.mxu0
    %v435 = vadd.f32 %v366, %v434
    %v436 = vpop.f32.mrf.mxu0
    %437 = vmatprep.mubr.f32.mxu0 %v306
    %438 = vmatmul.mubr.f32.gmra.mxu0 %v302
    %v439 = vpop.f32.mrf.mxu0
    %v440 = vadd.f32 %v366, %v439
    %v441 = vpop.f32.mrf.mxu0
    %442 = vmatprep.mubr.f32.mxu0 %v307
    %443 = vmatmul.mubr.f32.gmra.mxu0 %v303
    %v444 = vpop.f32.mrf.mxu0
    %v445 = vadd.f32 %v366, %v444
    %v446 = vpop.f32.mrf.mxu0
    %447 = vmatprep.mubr.f32.mxu0 %v308
    %448 = vmatmul.mubr.f32.gmra.mxu0 %v304
    %v449 = vpop.f32.mrf.mxu0
    %v450 = vadd.f32 %v366, %v449
    %v451 = vpop.f32.mrf.mxu0
    %452 = vdwg.mxu0
    %453 = vmatprep.subr.mxu0 0.0
    %454 = vmatpush1.msra.mxu0 %v360
    %455 = vmatprep.subr.mxu0 0.0
    %456 = vmatpush1.msra.mxu0 %v359
    %457 = vmatprep.subr.mxu0 0.0
    %458 = vmatpush1.msra.mxu0 %v358
    %459 = vmatprep.subr.mxu0 0.0
    %460 = vmatpush1.msra.mxu0 %v357
    %461 = vmatprep.subr.mxu0 0.0
    %462 = vmatpush1.msra.mxu0 %v356
    %463 = vmatprep.subr.mxu0 0.0
    %464 = vmatpush1.msra.mxu0 %v355
    %465 = vmatprep.subr.mxu0 0.0
    %466 = vmatpush1.msra.mxu0 %v354
    %467 = vmatprep.subr.mxu0 0.0
    %468 = vmatpush1.msra.mxu0 %v353
    %469 = vmatprep.subr.mxu0 0.0
    %470 = vmatpush1.msra.mxu0 %v352
    %471 = vmatprep.subr.mxu0 0.0
    %472 = vmatpush1.msra.mxu0 %v351
    %473 = vmatprep.subr.mxu0 0.0
    %474 = vmatpush1.msra.mxu0 %v350
    %475 = vmatprep.subr.mxu0 0.0
    %476 = vmatpush1.msra.mxu0 %v349
    %477 = vmatprep.subr.mxu0 0.0
    %478 = vmatpush1.msra.mxu0 %v348
    %479 = vmatprep.subr.mxu0 0.0
    %480 = vmatpush1.msra.mxu0 %v347
    %481 = vmatprep.subr.mxu0 0.0
    %482 = vmatpush1.msra.mxu0 %v346
    %483 = vmatprep.subr.mxu0 0.0
    %484 = vmatpush1.msra.mxu0 %v345
    %485 = vmatprep.subr.mxu0 0.0
    %486 = vmatpush2.msra.mxu0 0.0
    %487 = vmatprep.subr.mxu0 0.0
    %488 = vmatpush2.msra.mxu0 0.0
    %489 = vmatprep.subr.mxu0 0.0
    %490 = vmatpush2.msra.mxu0 0.0
    %491 = vmatprep.subr.mxu0 0.0
    %492 = vmatpush2.msra.mxu0 0.0
    %493 = vmatprep.subr.mxu0 0.0
    %494 = vmatpush2.msra.mxu0 0.0
    %495 = vmatprep.subr.mxu0 0.0
    %496 = vmatpush2.msra.mxu0 0.0
    %497 = vmatprep.subr.mxu0 0.0
    %498 = vmatpush2.msra.mxu0 0.0
    %499 = vmatprep.subr.mxu0 0.0
    %500 = vmatpush2.msra.mxu0 0.0
    %501 = vmatprep.subr.mxu0 0.0
    %502 = vmatpush2.msra.mxu0 0.0
    %503 = vmatprep.subr.mxu0 0.0
    %504 = vmatpush2.msra.mxu0 0.0
    %505 = vmatprep.subr.mxu0 0.0
    %506 = vmatpush2.msra.mxu0 0.0
    %507 = vmatprep.subr.mxu0 0.0
    %508 = vmatpush2.msra.mxu0 0.0
    %509 = vmatprep.subr.mxu0 0.0
    %510 = vmatpush2.msra.mxu0 0.0
    %511 = vmatprep.subr.mxu0 0.0
    %512 = vmatpush2.msra.mxu0 0.0
    %513 = vmatprep.subr.mxu0 0.0
    %514 = vmatpush2.msra.mxu0 0.0
    %515 = vmatprep.subr.mxu0 0.0
    %516 = vmatpush2.msra.mxu0 0.0
    %517 = vmatprep.mubr.f32.mxu0 0.0
    %518 = vmatmul.mubr.f32.gmra.mxu0 %v309
    %v519 = vpop.f32.mrf.mxu0
    %v520 = vadd.f32 %v435, %v519
    %v521 = vpop.f32.mrf.mxu0
    %522 = vmatprep.mubr.f32.mxu0 0.0
    %523 = vmatmul.mubr.f32.gmra.mxu0 %v310
    %v524 = vpop.f32.mrf.mxu0
    %v525 = vadd.f32 %v440, %v524
    %v526 = vpop.f32.mrf.mxu0
    %527 = vmatprep.mubr.f32.mxu0 0.0
    %528 = vmatmul.mubr.f32.gmra.mxu0 %v311
    %v529 = vpop.f32.mrf.mxu0
    %v530 = vadd.f32 %v445, %v529
    %v531 = vpop.f32.mrf.mxu0
    %532 = vmatprep.mubr.f32.mxu0 0.0
    %533 = vmatmul.mubr.f32.gmra.mxu0 %v312
    %v534 = vpop.f32.mrf.mxu0
    %v535 = vadd.f32 %v450, %v534
    %v536 = vpop.f32.mrf.mxu0
    %537 = vdwg.mxu0
    %v538 = vld [vmem:[%s1] sm:$0xff]
    %v539 = vld [vmem:[%s1 + $0x8] sm:$0xff]
    %v540 = vld [vmem:[%s1 + $0x10] sm:$0xff]
    %v541 = vld [vmem:[%s1 + $0x18] sm:$0xff]
    %v542 = vadd.f32 %v520, %v538
    %v543 = vadd.f32 %v525, %v539
    %v544 = vadd.f32 %v530, %v540
    %v545 = vadd.f32 %v535, %v541
    %v546 = vmax.f32 %v542, 0.0
    %v547 = vmax.f32 %v543, 0.0
    %v548 = vmax.f32 %v544, 0.0
    %v549 = vmax.f32 %v545, 0.0
    %550 = vst [vmem:[#allocation8] sm:$0xff] %v546
    %551 = vst [vmem:[#allocation8 + $0x8] sm:$0xff] %v547
    %552 = vst [vmem:[#allocation8 + $0x10] sm:$0xff] %v548
    %553 = vst [vmem:[#allocation8 + $0x18] sm:$0xff] %v549
    // Predicated region
    $region34: #{tpu_custom_call.1} parent=1 // pred_check
      _
    $region35: #{tpu_custom_call.1} parent=1 // pred_check_branch
      %555 = sbr.rel (0) target = $region37
    $region36: #{tpu_custom_call.1} parent=1 // pred_region
      %s557 = ssub.s32 512, 512
      %558 = vsyncadd [#allocation5], %s557
      %s559 = sshll.u32 [#allocation8], 4
      %s560 = int_to_ptr.vmem [resolvable:$true] %s559
      %565 = dma.vmem_to_hbm [thread:$0]  %s560, 512, %s6, [#allocation5], 128, 128, 8
    $region37: #{tpu_custom_call.1} parent=1 // pred_fallthru
      _
    // Predicated region
    $region38: #{tpu_custom_call.1} parent=1 // pred_check
      _
    $region39: #{tpu_custom_call.1} parent=1 // pred_check_branch
      %567 = sbr.rel (0) target = $region41
    $region40: #{tpu_custom_call.1} parent=1 // pred_region
      %568 = dma.done [#allocation5], 512
    $region41: #{tpu_custom_call.1} parent=1 // pred_fallthru
      _
    %569 = vsyncpa [#allocation4], 1
    %570 = vsyncpa [#allocation7], 1
    %571 = vsyncpa [#allocation5], 1

</llo_original>
